<compile_context>
chip_gen: v6e
topology: v6e:2x2x1
jax: 0.10.0
libtpu: 0.0.40
codegen_flags: <defaults>
</compile_context>

<pallas_src>
import numpy as np

import jax
import jax.numpy as jnp
from jax.experimental import pallas as pl
from jax.experimental.pallas import tpu as pltpu

N_QUBITS = 3
N_CFG = 2 * N_QUBITS          # 6 parameter-shift configurations
N_STATES = 32                 # 2^5 basis states from Statevector.probabilities()
GROUP = 4                     # samples packed per kernel row (4 * 32 = 128 lanes)
LANES = 128
PACK_COLS = GROUP * N_QUBITS            # 12 input columns per packed row
MEMBER_W = N_QUBITS * N_CFG             # 18 angle lanes per packed sample
CONST_LANE = GROUP * MEMBER_W           # 72: first unused lane, cos(0)=1 -> bias row
TILE_ROWS = 1024                        # max packed rows per grid step (VMEM-safe)
MONO_BLOCKS = 4                         # co | c*c | c*c | c*c*c stacked along K
INV_WEIGHT = np.float32(1.0 / (8.0 * N_CFG))   # 1/48 factored out of the bf16 W

# (basis index, (b0,b1,b2)); index = b0 + 2*b1 + 4*b2 + 8*(b0&b1) + 16*(b0&b1&b2)
_COMBOS = (
    (0, (0, 0, 0)), (1, (1, 0, 0)), (2, (0, 1, 0)), (11, (1, 1, 0)),
    (4, (0, 0, 1)), (5, (1, 0, 1)), (6, (0, 1, 1)), (31, (1, 1, 1)),
)


def _round_up(n, m):
    return ((n + m - 1) // m) * m


def _build_w_stack():
    """(4*128, 128) scatter matrix [W1;W2;W3;W4], entries in {0, +-1, 6}.

    In-kernel cos-tile lane layout: l = r*18 + i*6 + j holds
    cos(theta_cfg[i,j] * x[sample r, qubit i]); lane 72 holds cos(0) = 1.
    W1..W4 map the monomials {c_i, c_i*c_j, c0*c1*c2, 1} (W2/W3/W4 read the
    products formed on the c0/c1 lanes by the in-kernel lane rolls) to the
    mean-over-config basis-state probabilities at output lane r*32 + state.
    The common 1/(8*6) = 1/48 factor is divided out so every entry is a small
    integer -> exactly representable in bf16; it is re-applied in the kernel.
    """
    W = np.zeros((MONO_BLOCKS, LANES, LANES), np.float32)
    for r in range(GROUP):
        base = r * MEMBER_W
        for j in range(N_CFG):
            l0 = base + j                 # lane of cos(angle of qubit 0)
            l1 = base + N_CFG + j         # qubit 1
            l2 = base + 2 * N_CFG + j     # qubit 2
            for idx, bits in _COMBOS:
                o = r * N_STATES + idx
                g0 = 1.0 - 2.0 * bits[0]
                g1 = 1.0 - 2.0 * bits[1]
                g2 = 1.0 - 2.0 * bits[2]
                W[0, l0, o] += g0
                W[0, l1, o] += g1
                W[0, l2, o] += g2
                W[1, l0, o] += g0 * g1          # c0*c1 lives on c0 lanes
                W[1, l1, o] += g1 * g2          # c1*c2 lives on c1 lanes
                W[2, l0, o] += g0 * g2          # c0*c2 on c0 lanes
                W[3, l0, o] += g0 * g1 * g2     # c0*c1*c2 on c0 lanes
        for idx, _bits in _COMBOS:               # constant monomial: (1/8)/(1/48) = 6
            W[0, CONST_LANE, r * N_STATES + idx] += float(N_CFG)
    return W.reshape(MONO_BLOCKS * LANES, LANES)


_W_STACK = _build_w_stack()          # theta-independent, exact in bf16


def _shift_configs(theta):
    """(3, 6): th_cfg[i, j] = theta_i in the j-th parameter-shift configuration."""
    shift = jnp.float32(np.pi / 2)
    eye = jnp.eye(N_QUBITS, dtype=jnp.float32)
    cfgs = jnp.concatenate(
        [theta[None, :] + shift * eye, theta[None, :] - shift * eye], axis=0)  # (6, 3)
    return cfgs.T


def _build_angle_matrix(th_cfg):
    """(12, 128): A[3r+i, r*18 + i*6 + j] = th_cfg[i, j]; unused lanes stay 0."""
    rows, cols, qi, cj = [], [], [], []
    for r in range(GROUP):
        for i in range(N_QUBITS):
            for j in range(N_CFG):
                rows.append(r * N_QUBITS + i)
                cols.append(r * MEMBER_W + i * N_CFG + j)
                qi.append(i)
                cj.append(j)
    a = jnp.zeros((PACK_COLS, LANES), jnp.float32)
    return a.at[np.array(rows), np.array(cols)].set(
        th_cfg[np.array(qi), np.array(cj)])


def tnorm_kernel(x_ref, a_ref, w_ref, o_ref):
    """x_ref: (TB, 12) packed inputs (4 samples/row); a_ref: (12, 128) f32 angle
    matrix; w_ref: (512, 128) bf16 scatter matrix [W1;W2;W3;W4]; o_ref: (TB, 128)
    lane-dense output (4 samples x 32 basis states per row)."""
    # Angles: lane r*18 + i*6 + j = theta_cfg[i,j] * x[sample r, qubit i].
    # K=12 and exactness of the angles matters (cos amplifies relative error),
    # so keep this tiny matmul at f32 HIGHEST; it is a minor share of MXU work.
    ang = jnp.dot(x_ref[...], a_ref[...], preferred_element_type=jnp.float32,
                  precision=jax.lax.Precision.HIGHEST)      # (TB, 128)
    co = jnp.cos(ang)                    # unused lanes -> cos(0) = 1 (bias lane 72)

    # Lane alignment on the XLU (free co-issue) instead of MXU permuter matmuls.
    # jnp.roll semantics: result[l] = co[(l + 6) % 128] for shift = 128-6, so
    # c1 lands on c0's lane and c2 on c1's lane; shift = 128-12 puts c2 on c0's
    # lane.  Wrapped / cross-sample junk lands only on lanes whose W2/W3/W4
    # rows are zero.
    co_p6 = pltpu.roll(co, shift=LANES - 6, axis=1)
    co_p12 = pltpu.roll(co, shift=LANES - 12, axis=1)
    p01 = co * co_p6           # c0*c1 on c0 lanes, c1*c2 on c1 lanes
    p02 = co * co_p12          # c0*c2 on c0 lanes
    p012 = p01 * co_p12        # c0*c1*c2 on c0 lanes

    # Fused K=512 scatter matmul.  W entries are exact integers in bf16 (the
    # 1/48 weighting is factored out), so splitting the f32 monomials into
    # bf16 hi+lo halves makes the whole scatter two single-pass bf16 matmuls
    # with ~2^-18 absolute error -- far below the 1e-5 tolerance.
    cat = jnp.concatenate([co, p01, p02, p012], axis=1)      # (TB, 512) f32
    cat_hi = cat.astype(jnp.bfloat16)
    cat_lo = (cat - cat_hi.astype(jnp.float32)).astype(jnp.bfloat16)
    w = w_ref[...]                                           # (512, 128) bf16
    acc = jnp.dot(cat_hi, w, preferred_element_type=jnp.float32)
    acc = acc + jnp.dot(cat_lo, w, preferred_element_type=jnp.float32)
    o_ref[...] = (acc * INV_WEIGHT).astype(o_ref.dtype)


def _choose_tiling(rows):
    """Balanced tile size: >=2 grid steps when possible (v7x megacore), tiles
    capped at TILE_ROWS, padding bounded by <8 packed rows per grid step."""
    n_steps = max(2, pl.cdiv(rows, TILE_ROWS))
    tb = _round_up(pl.cdiv(rows, n_steps), 8)        # sublane-aligned
    rows_p = _round_up(rows, tb)
    return tb, rows_p


def learnable_tnorm_forward(inputs, theta):
    """Pallas TPU implementation of LearnableTnorm.forward.

    inputs: (B, 3) float32; theta: (3,) float32  ->  (B, 32) float32.
    """
    inputs = jnp.asarray(inputs, jnp.float32)
    theta = jnp.asarray(theta, jnp.float32)
    B = inputs.shape[0]

    rows = pl.cdiv(B, GROUP)                         # packed rows needed
    tb, rows_p = _choose_tiling(rows)
    b_pad = rows_p * GROUP

    x = jnp.zeros((b_pad, N_QUBITS), jnp.float32).at[:B].set(inputs)
    xg = x.reshape(rows_p, PACK_COLS)                # 4 samples per row

    a_mat = _build_angle_matrix(_shift_configs(theta))        # (12, 128) f32
    w_mat = jnp.asarray(_W_STACK, dtype=jnp.bfloat16)          # (512, 128), exact

    out = pl.pallas_call(
        tnorm_kernel,
        out_shape=jax.ShapeDtypeStruct((rows_p, LANES), jnp.float32),
        grid_spec=pl.GridSpec(
            grid=(rows_p // tb,),
            in_specs=[
                pl.BlockSpec((tb, PACK_COLS), lambda i: (i, 0)),
                pl.BlockSpec((PACK_COLS, LANES), lambda i: (0, 0)),
                pl.BlockSpec((MONO_BLOCKS * LANES, LANES), lambda i: (0, 0)),
            ],
            out_specs=pl.BlockSpec((tb, LANES), lambda i: (i, 0)),
        ),
        compiler_params=pltpu.CompilerParams(
            dimension_semantics=("parallel",),
        ),
    )(xg, a_mat, w_mat)

    # (rows_p, 128) row-major == (4*rows_p, 32) row-major: free reshape, then crop.
    return out.reshape(b_pad, N_STATES)[:B]


def _reference_forward(inputs, theta):
    """Pure-JAX reference of the analytic circuit + parameter-shift average."""
    shift = jnp.float32(np.pi / 2)
    eye = jnp.eye(N_QUBITS, dtype=jnp.float32)
    cfgs = jnp.concatenate(
        [theta[None, :] + shift * eye, theta[None, :] - shift * eye], axis=0)  # (6, 3)
    ang = inputs[:, None, :] * cfgs[None, :, :]        # (B, 6, 3)
    c = jnp.cos(0.5 * ang) ** 2
    s = jnp.sin(0.5 * ang) ** 2
    B = inputs.shape[0]
    probs = jnp.zeros((B, N_CFG, N_STATES), jnp.float32)
    for idx, bits in _COMBOS:
        term = jnp.ones((B, N_CFG), jnp.float32)
        for i, b in enumerate(bits):
            term = term * (s[..., i] if b else c[..., i])
        probs = probs.at[:, :, idx].set(term)
    return probs.mean(axis=1)


if __name__ == "__main__":
    key = jax.random.PRNGKey(0)
    k_x, k_theta = jax.random.split(key)
    theta = jax.random.normal(k_theta, (N_QUBITS,), dtype=jnp.float32)

    # B=10 exercises the ragged-batch padding path; B=98 exercises a 2-step grid.
    for B in (8, 10, 98):
        inputs = jax.random.normal(jax.random.fold_in(k_x, B), (B, N_QUBITS),
                                   dtype=jnp.float32)
        out = jax.block_until_ready(learnable_tnorm_forward(inputs, theta))
        ref = _reference_forward(inputs, theta)
        assert out.shape == (B, N_STATES)
        assert jnp.allclose(out, ref, atol=1e-5, rtol=1e-4), "mismatch vs reference"
        # probabilities of a valid quantum state sum to 1 per row
        assert jnp.allclose(out.sum(axis=-1), 1.0, atol=1e-4)

    print("KERNEL_OK")
</pallas_src>

<mosaic_0001>
module attributes {stable_mosaic.version = 11 : i64} {
  func.func @tnorm_kernel(%arg0: i32, %arg1: memref<8x12xf32, #tpu.memory_space<vmem>>, %arg2: memref<12x128xf32, #tpu.memory_space<vmem>>, %arg3: memref<512x128xbf16, #tpu.memory_space<vmem>>, %arg4: memref<8x128xf32, #tpu.memory_space<vmem>>) attributes {dimension_semantics = [#tpu.dimension_semantics<parallel>], iteration_bounds = array<i64: 1>, scalar_prefetch = 0 : i64, scratch_operands = 0 : i64, tpu.core_type = #tpu.core_type<tc>, window_params = [{transform_indices = @transform_0, window_bounds = array<i64: 8, 12>}, {pipeline_mode = #tpu.pipeline_mode<synchronous>, transform_indices = @transform_1, window_bounds = array<i64: 12, 128>}, {pipeline_mode = #tpu.pipeline_mode<synchronous>, transform_indices = @transform_2, window_bounds = array<i64: 512, 128>}, {transform_indices = @transform_3, window_bounds = array<i64: 8, 128>}]} {
    %c0 = arith.constant 0 : index
    %c0_0 = arith.constant 0 : index
    %0 = vector.load %arg1[%c0, %c0_0] : memref<8x12xf32, #tpu.memory_space<vmem>>, vector<8x12xf32>
    %c0_1 = arith.constant 0 : index
    %c0_2 = arith.constant 0 : index
    %1 = vector.load %arg2[%c0_1, %c0_2] : memref<12x128xf32, #tpu.memory_space<vmem>>, vector<12x128xf32>
    %cst = arith.constant dense<0.000000e+00> : vector<8x128xf32>
    %2 = tpu.matmul %0, %1, %cst {dimension_numbers = #tpu.dot_dimension_numbers<[1], [0], [0], [1], [0, 0, 1, 1], [], []>, precision = #tpu.contract_precision<fp32>} : vector<8x12xf32>, vector<12x128xf32>, vector<8x128xf32> -> vector<8x128xf32>
    %3 = math.cos %2 : vector<8x128xf32>
    %c122_i32 = arith.constant 122 : i32
    %4 = tpu.dynamic_rotate %3 by %c122_i32 dim 1 : vector<8x128xf32>, i32 -> vector<8x128xf32>
    %c116_i32 = arith.constant 116 : i32
    %5 = tpu.dynamic_rotate %3 by %c116_i32 dim 1 : vector<8x128xf32>, i32 -> vector<8x128xf32>
    %6 = arith.mulf %3, %4 : vector<8x128xf32>
    %7 = arith.mulf %3, %5 : vector<8x128xf32>
    %8 = arith.mulf %6, %5 : vector<8x128xf32>
    %9 = tpu.concatenate %3, %6, %7, %8 in 1 : vector<8x128xf32>, vector<8x128xf32>, vector<8x128xf32>, vector<8x128xf32> -> vector<8x512xf32>
    %10 = arith.truncf %9 : vector<8x512xf32> to vector<8x512xbf16>
    %11 = arith.extf %10 : vector<8x512xbf16> to vector<8x512xf32>
    %12 = arith.subf %9, %11 : vector<8x512xf32>
    %13 = arith.truncf %12 : vector<8x512xf32> to vector<8x512xbf16>
    %c0_3 = arith.constant 0 : index
    %c0_4 = arith.constant 0 : index
    %14 = vector.load %arg3[%c0_3, %c0_4] : memref<512x128xbf16, #tpu.memory_space<vmem>>, vector<512x128xbf16>
    %cst_5 = arith.constant dense<0.000000e+00> : vector<8x128xf32>
    %15 = tpu.matmul %10, %14, %cst_5 {dimension_numbers = #tpu.dot_dimension_numbers<[1], [0], [0], [1], [0, 0, 1, 1], [], []>} : vector<8x512xbf16>, vector<512x128xbf16>, vector<8x128xf32> -> vector<8x128xf32>
    %cst_6 = arith.constant dense<0.000000e+00> : vector<8x128xf32>
    %16 = tpu.matmul %13, %14, %cst_6 {dimension_numbers = #tpu.dot_dimension_numbers<[1], [0], [0], [1], [0, 0, 1, 1], [], []>} : vector<8x512xbf16>, vector<512x128xbf16>, vector<8x128xf32> -> vector<8x128xf32>
    %17 = arith.addf %15, %16 : vector<8x128xf32>
    %cst_7 = arith.constant 0.020833334 : f32
    %18 = vector.broadcast %cst_7 : f32 to vector<8x128xf32>
    %19 = arith.mulf %17, %18 : vector<8x128xf32>
    %c0_8 = arith.constant 0 : index
    %c0_9 = arith.constant 0 : index
    %20 = vector.load %arg4[%c0_8, %c0_9] : memref<8x128xf32, #tpu.memory_space<vmem>>, vector<8x128xf32>
    tpu.vector_store %arg4[%c0_8, %c0_9], %19 {strides = array<i32>} : memref<8x128xf32, #tpu.memory_space<vmem>>, vector<8x128xf32>,
    return
  }
  func.func @transform_0(%arg0: i32) -> (i32, i32) {
    %c0_i32 = arith.constant 0 : i32
    %c0_i32_0 = arith.constant 0 : i32
    return %arg0, %c0_i32 : i32, i32
  }
  func.func @transform_1(%arg0: i32) -> (i32, i32) {
    %c0_i32 = arith.constant 0 : i32
    %c0_i32_0 = arith.constant 0 : i32
    %c0_i32_1 = arith.constant 0 : i32
    return %c0_i32, %c0_i32_0 : i32, i32
  }
  func.func @transform_2(%arg0: i32) -> (i32, i32) {
    %c0_i32 = arith.constant 0 : i32
    %c0_i32_0 = arith.constant 0 : i32
    %c0_i32_1 = arith.constant 0 : i32
    return %c0_i32, %c0_i32_0 : i32, i32
  }
  func.func @transform_3(%arg0: i32) -> (i32, i32) {
    %c0_i32 = arith.constant 0 : i32
    %c0_i32_0 = arith.constant 0 : i32
    return %arg0, %c0_i32 : i32, i32
  }
}

</mosaic_0001>

<llo_original>
// kernel: tpu_custom_call.1
$region0: #{tpu_custom_call.1}
  #allocation0 [shape = 'u32[]', space=smem, size = 0x4, offset = 0x4, fixed_abs, tag = 'smem constant byte address 0x4 - core index']
  #allocation1 [shape = 'u32[144,128]{1,0:T(1,128)}', space=vmem, size = 0x12000, scoped, tag = 'internal scratch']
  %s0 = inlined_call_operand.hbm [shape: f32[8,12], index: 0, kind: input, shape index: {}]
  %s1 = inlined_call_operand.hbm [shape: f32[12,128], index: 1, kind: input, shape index: {}]
  %s2 = inlined_call_operand.hbm [shape: bf16[512,128], index: 2, kind: input, shape index: {}]
  %s3 = inlined_call_operand.hbm [shape: f32[8,128], index: 3, kind: output, shape index: {}]
  %s4 = sld [smem:[#allocation0]]
  $region34: #{tpu_custom_call.1} parent=0
    _
  %s6 = ssub.s32 1, %s4
  %s7 = scalar_select 0, %s6, %s4
  $region1: #{tpu_custom_call.1} parent=0
    #allocation2 [shape = 'u8[4096]{0}', space=vmem, size = 0x1000, scoped, tag = 'input window, operand 0, single buffered']
    #allocation3 [shape = 's32[1]{0}', space=sflag, size = 0x4, scoped, tag = 'scoped memory for tpu_custom_call.1']
    #allocation4 [shape = 's32[1]{0}', space=sflag, size = 0x4, scoped, tag = 'scoped memory for tpu_custom_call.1']
    #allocation5 [shape = 'u8[8192]{0}', space=vmem, size = 0x2000, scoped, tag = 'input window, operand 1, single buffered']
    #allocation6 [shape = 's32[1]{0}', space=sflag, size = 0x4, scoped, tag = 'scoped memory for tpu_custom_call.1']
    #allocation7 [shape = 'u8[131072]{0}', space=vmem, size = 0x20000, scoped, tag = 'input window, operand 2, single buffered']
    #allocation8 [shape = 'u8[4096]{0}', space=vmem, size = 0x1000, scoped, tag = 'output window, operand 0, single buffered']
    %8 = vsyncpa [#allocation3], 0
    %9 = vsyncpa [#allocation6], 0
    %10 = vsyncpa [#allocation4], 0
    // Predicated region
    $region2: #{tpu_custom_call.1} parent=1 // pred_check
      _
    $region3: #{tpu_custom_call.1} parent=1 // pred_check_branch
      %12 = sbr.rel (0) target = $region5
    $region4: #{tpu_custom_call.1} parent=1 // pred_region
      %s14 = ssub.s32 128, 128
      %15 = vsyncadd [#allocation3], %s14
      %s17 = sshll.u32 [#allocation2], 4
      %s18 = int_to_ptr.vmem [resolvable:$true] %s17
      %20 = dma.hbm_to_vmem [thread:$0]  %s0, 128, %s18, [#allocation3]
    $region5: #{tpu_custom_call.1} parent=1 // pred_fallthru
      _
    // Predicated region
    $region6: #{tpu_custom_call.1} parent=1 // pred_check
      _
    $region7: #{tpu_custom_call.1} parent=1 // pred_check_branch
      %22 = sbr.rel (0) target = $region9
    $region8: #{tpu_custom_call.1} parent=1 // pred_region
      %s24 = ssub.s32 256, 256
      %25 = vsyncadd [#allocation6], %s24
      %s26 = sshll.u32 [#allocation5], 4
      %s27 = int_to_ptr.vmem [resolvable:$true] %s26
      %32 = dma.hbm_to_vmem [thread:$0]  %s1, 256, %s27, [#allocation6], 128, 128, 8
    $region9: #{tpu_custom_call.1} parent=1 // pred_fallthru
      _
    // Predicated region
    $region10: #{tpu_custom_call.1} parent=1 // pred_check
      _
    $region11: #{tpu_custom_call.1} parent=1 // pred_check_branch
      %34 = sbr.rel (0) target = $region13
    $region12: #{tpu_custom_call.1} parent=1 // pred_region
      %s36 = ssub.s32 4096, 4096
      %37 = vsyncadd [#allocation6], %s36
      %s38 = sshll.u32 [#allocation7], 4
      %s39 = int_to_ptr.vmem [resolvable:$true] %s38
      %44 = dma.hbm_to_vmem [thread:$0]  %s2, 4096, %s39, [#allocation6], 64, 64, 4
    $region13: #{tpu_custom_call.1} parent=1 // pred_fallthru
      _
    // Predicated region
    $region14: #{tpu_custom_call.1} parent=1 // pred_check
      _
    $region15: #{tpu_custom_call.1} parent=1 // pred_check_branch
      %46 = sbr.rel (0) target = $region17
    $region16: #{tpu_custom_call.1} parent=1 // pred_region
      %47 = dma.done [#allocation3], 128
    $region17: #{tpu_custom_call.1} parent=1 // pred_fallthru
      _
    // Predicated region
    $region18: #{tpu_custom_call.1} parent=1 // pred_check
      _
    $region19: #{tpu_custom_call.1} parent=1 // pred_check_branch
      %49 = sbr.rel (0) target = $region21
    $region20: #{tpu_custom_call.1} parent=1 // pred_region
      %50 = dma.done [#allocation6], 256
    $region21: #{tpu_custom_call.1} parent=1 // pred_fallthru
      _
    // Predicated region
    $region22: #{tpu_custom_call.1} parent=1 // pred_check
      _
    $region23: #{tpu_custom_call.1} parent=1 // pred_check_branch
      %52 = sbr.rel (0) target = $region25
    $region24: #{tpu_custom_call.1} parent=1 // pred_region
      %53 = dma.done [#allocation6], 4096
    $region25: #{tpu_custom_call.1} parent=1 // pred_fallthru
      _
    %v55 = vld [vmem:[#allocation2] sm:$0xff]
    %v56 = vld [vmem:[#allocation5] sm:$0xff]
    %v57 = vld [vmem:[#allocation5 + $0x8] sm:$0xf]
    %vm58 = vcmask 97280
    %v60 = vsel %vm58, %v55, 0
    %vm62 = vcmask 1043456
    %v64 = vsel %vm62, %v57, 0
    %66 = vmatprep.subr.mxu0 0.0
    %67 = vmatpush1.msra.mxu0 0.0
    %68 = vmatprep.subr.mxu0 0.0
    %69 = vmatpush1.msra.mxu0 0.0
    %70 = vmatprep.subr.mxu0 0.0
    %71 = vmatpush1.msra.mxu0 0.0
    %72 = vmatprep.subr.mxu0 0.0
    %73 = vmatpush1.msra.mxu0 0.0
    %74 = vmatprep.subr.mxu0 0.0
    %75 = vmatpush1.msra.mxu0 0.0
    %76 = vmatprep.subr.mxu0 0.0
    %77 = vmatpush1.msra.mxu0 0.0
    %78 = vmatprep.subr.mxu0 0.0
    %79 = vmatpush1.msra.mxu0 0.0
    %80 = vmatprep.subr.mxu0 0.0
    %81 = vmatpush1.msra.mxu0 0.0
    %82 = vmatprep.subr.mxu0 0.0
    %83 = vmatpush1.msra.mxu0 0.0
    %84 = vmatprep.subr.mxu0 0.0
    %85 = vmatpush1.msra.mxu0 0.0
    %86 = vmatprep.subr.mxu0 0.0
    %87 = vmatpush1.msra.mxu0 0.0
    %88 = vmatprep.subr.mxu0 0.0
    %89 = vmatpush1.msra.mxu0 0.0
    %90 = vmatprep.subr.mxu0 0.0
    %91 = vmatpush1.msra.mxu0 0.0
    %92 = vmatprep.subr.mxu0 0.0
    %93 = vmatpush1.msra.mxu0 0.0
    %94 = vmatprep.subr.mxu0 0.0
    %v95 = vand.u32 %v64, 4294901760
    %96 = vmatpush1.msra.mxu0 %v95
    %97 = vmatprep.subr.mxu0 0.0
    %v98 = vand.u32 %v56, 4294901760
    %99 = vmatpush1.msra.mxu0 %v98
    %100 = vmatprep.subr.mxu0 0.0
    %101 = vmatpush2.msra.mxu0 0.0
    %102 = vmatprep.subr.mxu0 0.0
    %103 = vmatpush2.msra.mxu0 0.0
    %104 = vmatprep.subr.mxu0 0.0
    %105 = vmatpush2.msra.mxu0 0.0
    %106 = vmatprep.subr.mxu0 0.0
    %107 = vmatpush2.msra.mxu0 0.0
    %108 = vmatprep.subr.mxu0 0.0
    %109 = vmatpush2.msra.mxu0 0.0
    %110 = vmatprep.subr.mxu0 0.0
    %111 = vmatpush2.msra.mxu0 0.0
    %112 = vmatprep.subr.mxu0 0.0
    %113 = vmatpush2.msra.mxu0 0.0
    %114 = vmatprep.subr.mxu0 0.0
    %115 = vmatpush2.msra.mxu0 0.0
    %116 = vmatprep.subr.mxu0 0.0
    %117 = vmatpush2.msra.mxu0 0.0
    %118 = vmatprep.subr.mxu0 0.0
    %119 = vmatpush2.msra.mxu0 0.0
    %120 = vmatprep.subr.mxu0 0.0
    %121 = vmatpush2.msra.mxu0 0.0
    %122 = vmatprep.subr.mxu0 0.0
    %123 = vmatpush2.msra.mxu0 0.0
    %124 = vmatprep.subr.mxu0 0.0
    %125 = vmatpush2.msra.mxu0 0.0
    %126 = vmatprep.subr.mxu0 0.0
    %127 = vmatpush2.msra.mxu0 0.0
    %128 = vmatprep.subr.mxu0 0.0
    %129 = vmatpush2.msra.mxu0 0.0
    %130 = vmatprep.subr.mxu0 0.0
    %131 = vmatpush2.msra.mxu0 0.0
    %132 = vmatprep.mubr.f32.mxu0 0.0
    %v133 = vand.u32 %v60, 4294901760
    %v134 = vsub.f32 %v60, %v133
    %v135 = vand.u32 %v134, 4294901760
    %v136 = vsub.f32 %v134, %v135
    %v137 = vand.u32 %v136, 4294901760
    %138 = vmatmul.mubr.f32.gmra.mxu0 %v137
    %v139 = vpop.f32.mrf.mxu0
    %v140 = vadd.f32 0.0, %v139
    %v141 = vpop.f32.mrf.mxu0
    %142 = vdwg.mxu0
    %143 = vmatprep.subr.mxu0 0.0
    %144 = vmatpush1.msra.mxu0 0.0
    %145 = vmatprep.subr.mxu0 0.0
    %146 = vmatpush1.msra.mxu0 0.0
    %147 = vmatprep.subr.mxu0 0.0
    %148 = vmatpush1.msra.mxu0 0.0
    %149 = vmatprep.subr.mxu0 0.0
    %150 = vmatpush1.msra.mxu0 0.0
    %151 = vmatprep.subr.mxu0 0.0
    %152 = vmatpush1.msra.mxu0 0.0
    %153 = vmatprep.subr.mxu0 0.0
    %154 = vmatpush1.msra.mxu0 0.0
    %155 = vmatprep.subr.mxu0 0.0
    %156 = vmatpush1.msra.mxu0 0.0
    %157 = vmatprep.subr.mxu0 0.0
    %158 = vmatpush1.msra.mxu0 0.0
    %159 = vmatprep.subr.mxu0 0.0
    %160 = vmatpush1.msra.mxu0 0.0
    %161 = vmatprep.subr.mxu0 0.0
    %162 = vmatpush1.msra.mxu0 0.0
    %163 = vmatprep.subr.mxu0 0.0
    %164 = vmatpush1.msra.mxu0 0.0
    %165 = vmatprep.subr.mxu0 0.0
    %166 = vmatpush1.msra.mxu0 0.0
    %167 = vmatprep.subr.mxu0 0.0
    %168 = vmatpush1.msra.mxu0 0.0
    %169 = vmatprep.subr.mxu0 0.0
    %170 = vmatpush1.msra.mxu0 0.0
    %171 = vmatprep.subr.mxu0 0.0
    %v172 = vand.u32 %v64, 4294901760
    %v173 = vsub.f32 %v64, %v172
    %v174 = vand.u32 %v173, 4294901760
    %v175 = vsub.f32 %v173, %v174
    %v176 = vand.u32 %v175, 4294901760
    %177 = vmatpush1.msra.mxu0 %v176
    %178 = vmatprep.subr.mxu0 0.0
    %v179 = vand.u32 %v56, 4294901760
    %v180 = vsub.f32 %v56, %v179
    %v181 = vand.u32 %v180, 4294901760
    %v182 = vsub.f32 %v180, %v181
    %v183 = vand.u32 %v182, 4294901760
    %184 = vmatpush1.msra.mxu0 %v183
    %185 = vmatprep.subr.mxu0 0.0
    %186 = vmatpush2.msra.mxu0 0.0
    %187 = vmatprep.subr.mxu0 0.0
    %188 = vmatpush2.msra.mxu0 0.0
    %189 = vmatprep.subr.mxu0 0.0
    %190 = vmatpush2.msra.mxu0 0.0
    %191 = vmatprep.subr.mxu0 0.0
    %192 = vmatpush2.msra.mxu0 0.0
    %193 = vmatprep.subr.mxu0 0.0
    %194 = vmatpush2.msra.mxu0 0.0
    %195 = vmatprep.subr.mxu0 0.0
    %196 = vmatpush2.msra.mxu0 0.0
    %197 = vmatprep.subr.mxu0 0.0
    %198 = vmatpush2.msra.mxu0 0.0
    %199 = vmatprep.subr.mxu0 0.0
    %200 = vmatpush2.msra.mxu0 0.0
    %201 = vmatprep.subr.mxu0 0.0
    %202 = vmatpush2.msra.mxu0 0.0
    %203 = vmatprep.subr.mxu0 0.0
    %204 = vmatpush2.msra.mxu0 0.0
    %205 = vmatprep.subr.mxu0 0.0
    %206 = vmatpush2.msra.mxu0 0.0
    %207 = vmatprep.subr.mxu0 0.0
    %208 = vmatpush2.msra.mxu0 0.0
    %209 = vmatprep.subr.mxu0 0.0
    %210 = vmatpush2.msra.mxu0 0.0
    %211 = vmatprep.subr.mxu0 0.0
    %212 = vmatpush2.msra.mxu0 0.0
    %213 = vmatprep.subr.mxu0 0.0
    %214 = vmatpush2.msra.mxu0 0.0
    %215 = vmatprep.subr.mxu0 0.0
    %216 = vmatpush2.msra.mxu0 0.0
    %217 = vmatprep.mubr.f32.mxu0 0.0
    %v218 = vand.u32 %v60, 4294901760
    %219 = vmatmul.mubr.f32.gmra.mxu0 %v218
    %v220 = vpop.f32.mrf.mxu0
    %v221 = vadd.f32 %v140, %v220
    %v222 = vpop.f32.mrf.mxu0
    %223 = vdwg.mxu0
    %224 = vmatprep.subr.mxu0 0.0
    %225 = vmatpush1.msra.mxu0 0.0
    %226 = vmatprep.subr.mxu0 0.0
    %227 = vmatpush1.msra.mxu0 0.0
    %228 = vmatprep.subr.mxu0 0.0
    %229 = vmatpush1.msra.mxu0 0.0
    %230 = vmatprep.subr.mxu0 0.0
    %231 = vmatpush1.msra.mxu0 0.0
    %232 = vmatprep.subr.mxu0 0.0
    %233 = vmatpush1.msra.mxu0 0.0
    %234 = vmatprep.subr.mxu0 0.0
    %235 = vmatpush1.msra.mxu0 0.0
    %236 = vmatprep.subr.mxu0 0.0
    %237 = vmatpush1.msra.mxu0 0.0
    %238 = vmatprep.subr.mxu0 0.0
    %239 = vmatpush1.msra.mxu0 0.0
    %240 = vmatprep.subr.mxu0 0.0
    %241 = vmatpush1.msra.mxu0 0.0
    %242 = vmatprep.subr.mxu0 0.0
    %243 = vmatpush1.msra.mxu0 0.0
    %244 = vmatprep.subr.mxu0 0.0
    %245 = vmatpush1.msra.mxu0 0.0
    %246 = vmatprep.subr.mxu0 0.0
    %247 = vmatpush1.msra.mxu0 0.0
    %248 = vmatprep.subr.mxu0 0.0
    %249 = vmatpush1.msra.mxu0 0.0
    %250 = vmatprep.subr.mxu0 0.0
    %251 = vmatpush1.msra.mxu0 0.0
    %252 = vmatprep.subr.mxu0 0.0
    %v253 = vand.u32 %v64, 4294901760
    %v254 = vsub.f32 %v64, %v253
    %255 = vmatpush1.msra.mxu0 %v254
    %256 = vmatprep.subr.mxu0 0.0
    %v257 = vand.u32 %v56, 4294901760
    %v258 = vsub.f32 %v56, %v257
    %259 = vmatpush1.msra.mxu0 %v258
    %260 = vmatprep.subr.mxu0 0.0
    %261 = vmatpush2.msra.mxu0 0.0
    %262 = vmatprep.subr.mxu0 0.0
    %263 = vmatpush2.msra.mxu0 0.0
    %264 = vmatprep.subr.mxu0 0.0
    %265 = vmatpush2.msra.mxu0 0.0
    %266 = vmatprep.subr.mxu0 0.0
    %267 = vmatpush2.msra.mxu0 0.0
    %268 = vmatprep.subr.mxu0 0.0
    %269 = vmatpush2.msra.mxu0 0.0
    %270 = vmatprep.subr.mxu0 0.0
    %271 = vmatpush2.msra.mxu0 0.0
    %272 = vmatprep.subr.mxu0 0.0
    %273 = vmatpush2.msra.mxu0 0.0
    %274 = vmatprep.subr.mxu0 0.0
    %275 = vmatpush2.msra.mxu0 0.0
    %276 = vmatprep.subr.mxu0 0.0
    %277 = vmatpush2.msra.mxu0 0.0
    %278 = vmatprep.subr.mxu0 0.0
    %279 = vmatpush2.msra.mxu0 0.0
    %280 = vmatprep.subr.mxu0 0.0
    %281 = vmatpush2.msra.mxu0 0.0
    %282 = vmatprep.subr.mxu0 0.0
    %283 = vmatpush2.msra.mxu0 0.0
    %284 = vmatprep.subr.mxu0 0.0
    %285 = vmatpush2.msra.mxu0 0.0
    %286 = vmatprep.subr.mxu0 0.0
    %287 = vmatpush2.msra.mxu0 0.0
    %288 = vmatprep.subr.mxu0 0.0
    %289 = vmatpush2.msra.mxu0 0.0
    %290 = vmatprep.subr.mxu0 0.0
    %291 = vmatpush2.msra.mxu0 0.0
    %292 = vmatprep.mubr.f32.mxu0 0.0
    %v293 = vand.u32 %v60, 4294901760
    %v294 = vsub.f32 %v60, %v293
    %295 = vmatmul.mubr.f32.gmra.mxu0 %v294
    %v296 = vpop.f32.mrf.mxu0
    %v297 = vadd.f32 %v221, %v296
    %v298 = vpop.f32.mrf.mxu0
    %299 = vdwg.mxu0
    %300 = vmatprep.subr.mxu0 0.0
    %301 = vmatpush1.msra.mxu0 0.0
    %302 = vmatprep.subr.mxu0 0.0
    %303 = vmatpush1.msra.mxu0 0.0
    %304 = vmatprep.subr.mxu0 0.0
    %305 = vmatpush1.msra.mxu0 0.0
    %306 = vmatprep.subr.mxu0 0.0
    %307 = vmatpush1.msra.mxu0 0.0
    %308 = vmatprep.subr.mxu0 0.0
    %309 = vmatpush1.msra.mxu0 0.0
    %310 = vmatprep.subr.mxu0 0.0
    %311 = vmatpush1.msra.mxu0 0.0
    %312 = vmatprep.subr.mxu0 0.0
    %313 = vmatpush1.msra.mxu0 0.0
    %314 = vmatprep.subr.mxu0 0.0
    %315 = vmatpush1.msra.mxu0 0.0
    %316 = vmatprep.subr.mxu0 0.0
    %317 = vmatpush1.msra.mxu0 0.0
    %318 = vmatprep.subr.mxu0 0.0
    %319 = vmatpush1.msra.mxu0 0.0
    %320 = vmatprep.subr.mxu0 0.0
    %321 = vmatpush1.msra.mxu0 0.0
    %322 = vmatprep.subr.mxu0 0.0
    %323 = vmatpush1.msra.mxu0 0.0
    %324 = vmatprep.subr.mxu0 0.0
    %325 = vmatpush1.msra.mxu0 0.0
    %326 = vmatprep.subr.mxu0 0.0
    %327 = vmatpush1.msra.mxu0 0.0
    %328 = vmatprep.subr.mxu0 0.0
    %v329 = vand.u32 %v64, 4294901760
    %330 = vmatpush1.msra.mxu0 %v329
    %331 = vmatprep.subr.mxu0 0.0
    %v332 = vand.u32 %v56, 4294901760
    %333 = vmatpush1.msra.mxu0 %v332
    %334 = vmatprep.subr.mxu0 0.0
    %335 = vmatpush2.msra.mxu0 0.0
    %336 = vmatprep.subr.mxu0 0.0
    %337 = vmatpush2.msra.mxu0 0.0
    %338 = vmatprep.subr.mxu0 0.0
    %339 = vmatpush2.msra.mxu0 0.0
    %340 = vmatprep.subr.mxu0 0.0
    %341 = vmatpush2.msra.mxu0 0.0
    %342 = vmatprep.subr.mxu0 0.0
    %343 = vmatpush2.msra.mxu0 0.0
    %344 = vmatprep.subr.mxu0 0.0
    %345 = vmatpush2.msra.mxu0 0.0
    %346 = vmatprep.subr.mxu0 0.0
    %347 = vmatpush2.msra.mxu0 0.0
    %348 = vmatprep.subr.mxu0 0.0
    %349 = vmatpush2.msra.mxu0 0.0
    %350 = vmatprep.subr.mxu0 0.0
    %351 = vmatpush2.msra.mxu0 0.0
    %352 = vmatprep.subr.mxu0 0.0
    %353 = vmatpush2.msra.mxu0 0.0
    %354 = vmatprep.subr.mxu0 0.0
    %355 = vmatpush2.msra.mxu0 0.0
    %356 = vmatprep.subr.mxu0 0.0
    %357 = vmatpush2.msra.mxu0 0.0
    %358 = vmatprep.subr.mxu0 0.0
    %359 = vmatpush2.msra.mxu0 0.0
    %360 = vmatprep.subr.mxu0 0.0
    %361 = vmatpush2.msra.mxu0 0.0
    %362 = vmatprep.subr.mxu0 0.0
    %363 = vmatpush2.msra.mxu0 0.0
    %364 = vmatprep.subr.mxu0 0.0
    %365 = vmatpush2.msra.mxu0 0.0
    %366 = vmatprep.mubr.f32.mxu0 0.0
    %v367 = vand.u32 %v60, 4294901760
    %v368 = vsub.f32 %v60, %v367
    %v369 = vand.u32 %v368, 4294901760
    %370 = vmatmul.mubr.f32.gmra.mxu0 %v369
    %v371 = vpop.f32.mrf.mxu0
    %v372 = vadd.f32 %v297, %v371
    %v373 = vpop.f32.mrf.mxu0
    %374 = vdwg.mxu0
    %375 = vmatprep.subr.mxu0 0.0
    %376 = vmatpush1.msra.mxu0 0.0
    %377 = vmatprep.subr.mxu0 0.0
    %378 = vmatpush1.msra.mxu0 0.0
    %379 = vmatprep.subr.mxu0 0.0
    %380 = vmatpush1.msra.mxu0 0.0
    %381 = vmatprep.subr.mxu0 0.0
    %382 = vmatpush1.msra.mxu0 0.0
    %383 = vmatprep.subr.mxu0 0.0
    %384 = vmatpush1.msra.mxu0 0.0
    %385 = vmatprep.subr.mxu0 0.0
    %386 = vmatpush1.msra.mxu0 0.0
    %387 = vmatprep.subr.mxu0 0.0
    %388 = vmatpush1.msra.mxu0 0.0
    %389 = vmatprep.subr.mxu0 0.0
    %390 = vmatpush1.msra.mxu0 0.0
    %391 = vmatprep.subr.mxu0 0.0
    %392 = vmatpush1.msra.mxu0 0.0
    %393 = vmatprep.subr.mxu0 0.0
    %394 = vmatpush1.msra.mxu0 0.0
    %395 = vmatprep.subr.mxu0 0.0
    %396 = vmatpush1.msra.mxu0 0.0
    %397 = vmatprep.subr.mxu0 0.0
    %398 = vmatpush1.msra.mxu0 0.0
    %399 = vmatprep.subr.mxu0 0.0
    %400 = vmatpush1.msra.mxu0 0.0
    %401 = vmatprep.subr.mxu0 0.0
    %402 = vmatpush1.msra.mxu0 0.0
    %403 = vmatprep.subr.mxu0 0.0
    %v404 = vand.u32 %v64, 4294901760
    %v405 = vsub.f32 %v64, %v404
    %v406 = vand.u32 %v405, 4294901760
    %407 = vmatpush1.msra.mxu0 %v406
    %408 = vmatprep.subr.mxu0 0.0
    %v409 = vand.u32 %v56, 4294901760
    %v410 = vsub.f32 %v56, %v409
    %v411 = vand.u32 %v410, 4294901760
    %412 = vmatpush1.msra.mxu0 %v411
    %413 = vmatprep.subr.mxu0 0.0
    %414 = vmatpush2.msra.mxu0 0.0
    %415 = vmatprep.subr.mxu0 0.0
    %416 = vmatpush2.msra.mxu0 0.0
    %417 = vmatprep.subr.mxu0 0.0
    %418 = vmatpush2.msra.mxu0 0.0
    %419 = vmatprep.subr.mxu0 0.0
    %420 = vmatpush2.msra.mxu0 0.0
    %421 = vmatprep.subr.mxu0 0.0
    %422 = vmatpush2.msra.mxu0 0.0
    %423 = vmatprep.subr.mxu0 0.0
    %424 = vmatpush2.msra.mxu0 0.0
    %425 = vmatprep.subr.mxu0 0.0
    %426 = vmatpush2.msra.mxu0 0.0
    %427 = vmatprep.subr.mxu0 0.0
    %428 = vmatpush2.msra.mxu0 0.0
    %429 = vmatprep.subr.mxu0 0.0
    %430 = vmatpush2.msra.mxu0 0.0
    %431 = vmatprep.subr.mxu0 0.0
    %432 = vmatpush2.msra.mxu0 0.0
    %433 = vmatprep.subr.mxu0 0.0
    %434 = vmatpush2.msra.mxu0 0.0
    %435 = vmatprep.subr.mxu0 0.0
    %436 = vmatpush2.msra.mxu0 0.0
    %437 = vmatprep.subr.mxu0 0.0
    %438 = vmatpush2.msra.mxu0 0.0
    %439 = vmatprep.subr.mxu0 0.0
    %440 = vmatpush2.msra.mxu0 0.0
    %441 = vmatprep.subr.mxu0 0.0
    %442 = vmatpush2.msra.mxu0 0.0
    %443 = vmatprep.subr.mxu0 0.0
    %444 = vmatpush2.msra.mxu0 0.0
    %445 = vmatprep.mubr.f32.mxu0 0.0
    %v446 = vand.u32 %v60, 4294901760
    %447 = vmatmul.mubr.f32.gmra.mxu0 %v446
    %v448 = vpop.f32.mrf.mxu0
    %v449 = vadd.f32 %v372, %v448
    %v450 = vpop.f32.mrf.mxu0
    %451 = vdwg.mxu0
    %452 = vmatprep.subr.mxu0 0.0
    %453 = vmatpush1.msra.mxu0 0.0
    %454 = vmatprep.subr.mxu0 0.0
    %455 = vmatpush1.msra.mxu0 0.0
    %456 = vmatprep.subr.mxu0 0.0
    %457 = vmatpush1.msra.mxu0 0.0
    %458 = vmatprep.subr.mxu0 0.0
    %459 = vmatpush1.msra.mxu0 0.0
    %460 = vmatprep.subr.mxu0 0.0
    %461 = vmatpush1.msra.mxu0 0.0
    %462 = vmatprep.subr.mxu0 0.0
    %463 = vmatpush1.msra.mxu0 0.0
    %464 = vmatprep.subr.mxu0 0.0
    %465 = vmatpush1.msra.mxu0 0.0
    %466 = vmatprep.subr.mxu0 0.0
    %467 = vmatpush1.msra.mxu0 0.0
    %468 = vmatprep.subr.mxu0 0.0
    %469 = vmatpush1.msra.mxu0 0.0
    %470 = vmatprep.subr.mxu0 0.0
    %471 = vmatpush1.msra.mxu0 0.0
    %472 = vmatprep.subr.mxu0 0.0
    %473 = vmatpush1.msra.mxu0 0.0
    %474 = vmatprep.subr.mxu0 0.0
    %475 = vmatpush1.msra.mxu0 0.0
    %476 = vmatprep.subr.mxu0 0.0
    %477 = vmatpush1.msra.mxu0 0.0
    %478 = vmatprep.subr.mxu0 0.0
    %479 = vmatpush1.msra.mxu0 0.0
    %480 = vmatprep.subr.mxu0 0.0
    %v481 = vand.u32 %v64, 4294901760
    %482 = vmatpush1.msra.mxu0 %v481
    %483 = vmatprep.subr.mxu0 0.0
    %v484 = vand.u32 %v56, 4294901760
    %485 = vmatpush1.msra.mxu0 %v484
    %486 = vmatprep.subr.mxu0 0.0
    %487 = vmatpush2.msra.mxu0 0.0
    %488 = vmatprep.subr.mxu0 0.0
    %489 = vmatpush2.msra.mxu0 0.0
    %490 = vmatprep.subr.mxu0 0.0
    %491 = vmatpush2.msra.mxu0 0.0
    %492 = vmatprep.subr.mxu0 0.0
    %493 = vmatpush2.msra.mxu0 0.0
    %494 = vmatprep.subr.mxu0 0.0
    %495 = vmatpush2.msra.mxu0 0.0
    %496 = vmatprep.subr.mxu0 0.0
    %497 = vmatpush2.msra.mxu0 0.0
    %498 = vmatprep.subr.mxu0 0.0
    %499 = vmatpush2.msra.mxu0 0.0
    %500 = vmatprep.subr.mxu0 0.0
    %501 = vmatpush2.msra.mxu0 0.0
    %502 = vmatprep.subr.mxu0 0.0
    %503 = vmatpush2.msra.mxu0 0.0
    %504 = vmatprep.subr.mxu0 0.0
    %505 = vmatpush2.msra.mxu0 0.0
    %506 = vmatprep.subr.mxu0 0.0
    %507 = vmatpush2.msra.mxu0 0.0
    %508 = vmatprep.subr.mxu0 0.0
    %509 = vmatpush2.msra.mxu0 0.0
    %510 = vmatprep.subr.mxu0 0.0
    %511 = vmatpush2.msra.mxu0 0.0
    %512 = vmatprep.subr.mxu0 0.0
    %513 = vmatpush2.msra.mxu0 0.0
    %514 = vmatprep.subr.mxu0 0.0
    %515 = vmatpush2.msra.mxu0 0.0
    %516 = vmatprep.subr.mxu0 0.0
    %517 = vmatpush2.msra.mxu0 0.0
    %518 = vmatprep.mubr.f32.mxu0 0.0
    %v519 = vand.u32 %v60, 4294901760
    %520 = vmatmul.mubr.f32.gmra.mxu0 %v519
    %v521 = vpop.f32.mrf.mxu0
    %v522 = vadd.f32 %v449, %v521
    %v523 = vpop.f32.mrf.mxu0
    %524 = vdwg.mxu0
    %v525 = vand.u32 2147483647, %v522
    %vm526 = vcmp.le.f32.partialorder %v525, 0.7853982
    %vm527 = vcmp.lt.s32.totalorder %v522, 0
    %v528 = vand.u32 %v522, 2139095040
    %v529 = vshrl.u32 %v528, 23
    %v530 = vsub.s32 %v529, 127
    %v531 = vand.u32 2147483647, %v522
    %v532 = vand.u32 %v531, 8388607
    %v533 = vor.u32 %v532, 8388608
    %v534 = vsub.s32 0, %v533
    %v535 = vadd.s32 %v530, 1
    %vm536 = vcmp.gt.s32.totalorder %v535, 0
    %v537 = vsel %vm536, %v535, 0
    %v538 = vshrl.u32 %v537, 5
    %v539 = vand.u32 %v537, 31
    %v540 = vsub.s32 32, %v539
    %v541 = vshrl.u32 683565275, %v540
    %v542 = vshll.u32 683565275, %v539
    %v543 = vshrl.u32 2475754826, %v540
    %v544 = vor.u32 %v542, %v543
    %v545 = vshll.u32 2475754826, %v539
    %v546 = vshrl.u32 2131351028, %v540
    %v547 = vor.u32 %v545, %v546
    %v548 = vshll.u32 2131351028, %v539
    %v549 = vshrl.u32 2102212464, %v540
    %v550 = vor.u32 %v548, %v549
    %v551 = vshll.u32 2102212464, %v539
    %v552 = vshrl.u32 920167782, %v540
    %v553 = vor.u32 %v551, %v552
    %v554 = vshll.u32 920167782, %v539
    %v555 = vshrl.u32 1326507024, %v540
    %v556 = vor.u32 %v554, %v555
    %vm557 = vcmp.lt.s32.totalorder %v538, 1
    %vm558 = vcmp.lt.s32.totalorder %v538, 2
    %vm559 = vcmp.lt.s32.totalorder %v538, 3
    %vm560 = vcmp.lt.s32.totalorder %v538, 4
    %v561 = vsel %vm557, %v541, %v544
    %v562 = vsel %vm560, %v550, 2102212464
    %v563 = vsel %vm559, %v547, %v562
    %v564 = vsel %vm558, %v561, %v563
    %v565 = vsel %vm557, %v544, %v547
    %v566 = vsel %vm560, %v553, 920167782
    %v567 = vsel %vm559, %v550, %v566
    %v568 = vsel %vm558, %v565, %v567
    %v569 = vsel %vm557, %v547, %v550
    %v570 = vsel %vm560, %v556, 1326507024
    %v571 = vsel %vm559, %v553, %v570
    %v572 = vsel %vm558, %v569, %v571
    %v573 = vshll.u32 %v533, 8
    %v574 = vmul.u32.u64.compose %v573, %v572
    %v575 = vextract.low.u32 %v574
    %v576 = vextract.high.u32 %v574
    %v577 = vmul.u32.u64.compose %v573, %v568
    %v578 = vextract.low.u32 %v577
    %v579 = vextract.high.u32 %v577
    %v580 = vmul.u32 %v573, %v564
    %v581 = vadd.s32 %v576, %v578
    %vm582 = vc.u32 %v576, %v578
    %v583 = vadd.s32 %v579, 1
    %v584 = vsel %vm582, %v583, %v579
    %v585 = vadd.s32 %v580, %v584
    %v586 = vadd.s32 %v585, 536870912
    %v587 = vshrl.u32 %v586, 30
    %v588 = vshll.u32 %v587, 30
    %v589 = vsub.s32 %v585, %v588
    %vm590 = vcmp.lt.s32.totalorder %v589, 0
    %v591 = vsub.s32 0, %v589
    %v592 = vsel %vm590, %v591, %v589
    %v593 = vclz %v592
    %v594 = vsub.s32 %v593, 2
    %vm595 = vcmp.gt.s32.totalorder 0, %v594
    %v596 = vsel %vm595, 0, %v594
    %v597 = vsub.s32 32, %v596
    %v598 = vshll.u32 %v589, %v596
    %v599 = vshrl.u32 %v581, %v597
    %v600 = vor.u32 %v598, %v599
    %v601 = vsub.s32 4294967266, %v596
    %v602 = vadd.s32 %v601, 127
    %v603 = vshll.u32 %v602, 23
    %v604 = vor.u32 4788187, %v603
    %v605 = vand.u32 2147483647, %v604
    %v607 = vcvt.s32.f32 %v600
    %v608 = vmul.f32 %v607, %v605
    %v609 = vxor.u32 %v608, 2147483648
    %v610 = vsel %vm527, %v609, %v608
    %v611 = vsub.s32 4, %v587
    %v612 = vsel %vm527, %v611, %v587
    %v613 = vsel %vm526, %v522, %v610
    %v614 = vsel %vm526, 0, %v612
    %v615 = vcosq.f32.pop %v613
    %v616 = vsinq.f32.pop %v613
    %vm617 = vweird.f32 %v522
    %v618 = vand.u32 %v614, 3
    %vm619 = vcmp.lt.s32.totalorder %v618, 2
    %vm620 = vcmp.eq.s32.totalorder %v618, 0
    %v621 = vxor.u32 %v616, 2147483648
    %v622 = vsel %vm620, %v615, %v621
    %vm623 = vcmp.eq.s32.totalorder %v618, 2
    %v624 = vxor.u32 %v615, 2147483648
    %v625 = vsel %vm623, %v624, %v616
    %v626 = vsel %vm619, %v622, %v625
    %v627 = vsel %vm617, nan, %v626
    %628 = vrot.lane.b32.xlu0 %v627, 122
    %v629 = vpop.permute.xlu0 %628
    %630 = vrot.lane.b32.xlu0 %v627, 116
    %v631 = vpop.permute.xlu0 %630
    %v632 = vmul.f32 %v627, %v629
    %v633 = vmul.f32 %v627, %v631
    %v634 = vmul.f32 %v632, %v631
    %v635 = vpack.c.bf16 %v627, %v627
    %v636 = vpack.c.bf16 %v632, %v632
    %v637 = vpack.c.bf16 %v633, %v633
    %v638 = vpack.c.bf16 %v634, %v634
    %v639 = vunpack.c.l.bf16 %v635
    %v640 = vunpack.c.l.bf16 %v636
    %v641 = vunpack.c.l.bf16 %v637
    %v642 = vunpack.c.l.bf16 %v638
    %v643 = vsub.f32 %v627, %v639
    %v644 = vsub.f32 %v632, %v640
    %v645 = vsub.f32 %v633, %v641
    %v646 = vsub.f32 %v634, %v642
    %v647 = vpack.c.bf16 %v643, %v643
    %v648 = vpack.c.bf16 %v644, %v644
    %v649 = vpack.c.bf16 %v645, %v645
    %v650 = vpack.c.bf16 %v646, %v646
    %v651 = vld [vmem:[#allocation7] sm:$0xf]
    %v652 = vld [vmem:[#allocation7 + $0x4] sm:$0xf]
    %v653 = vld [vmem:[#allocation7 + $0x8] sm:$0xf]
    %v654 = vld [vmem:[#allocation7 + $0xc] sm:$0xf]
    %v655 = vld [vmem:[#allocation7 + $0x10] sm:$0xf]
    %v656 = vld [vmem:[#allocation7 + $0x14] sm:$0xf]
    %v657 = vld [vmem:[#allocation7 + $0x18] sm:$0xf]
    %v658 = vld [vmem:[#allocation7 + $0x1c] sm:$0xf]
    %v659 = vld [vmem:[#allocation7 + $0x20] sm:$0xf]
    %v660 = vld [vmem:[#allocation7 + $0x24] sm:$0xf]
    %v661 = vld [vmem:[#allocation7 + $0x28] sm:$0xf]
    %v662 = vld [vmem:[#allocation7 + $0x2c] sm:$0xf]
    %v663 = vld [vmem:[#allocation7 + $0x30] sm:$0xf]
    %v664 = vld [vmem:[#allocation7 + $0x34] sm:$0xf]
    %v665 = vld [vmem:[#allocation7 + $0x38] sm:$0xf]
    %v666 = vld [vmem:[#allocation7 + $0x3c] sm:$0xf]
    %v667 = vld [vmem:[#allocation7 + $0x40] sm:$0xf]
    %v668 = vld [vmem:[#allocation7 + $0x44] sm:$0xf]
    %v669 = vld [vmem:[#allocation7 + $0x48] sm:$0xf]
    %v670 = vld [vmem:[#allocation7 + $0x4c] sm:$0xf]
    %v671 = vld [vmem:[#allocation7 + $0x50] sm:$0xf]
    %v672 = vld [vmem:[#allocation7 + $0x54] sm:$0xf]
    %v673 = vld [vmem:[#allocation7 + $0x58] sm:$0xf]
    %v674 = vld [vmem:[#allocation7 + $0x5c] sm:$0xf]
    %v675 = vld [vmem:[#allocation7 + $0x60] sm:$0xf]
    %v676 = vld [vmem:[#allocation7 + $0x64] sm:$0xf]
    %v677 = vld [vmem:[#allocation7 + $0x68] sm:$0xf]
    %v678 = vld [vmem:[#allocation7 + $0x6c] sm:$0xf]
    %v679 = vld [vmem:[#allocation7 + $0x70] sm:$0xf]
    %v680 = vld [vmem:[#allocation7 + $0x74] sm:$0xf]
    %v681 = vld [vmem:[#allocation7 + $0x78] sm:$0xf]
    %v682 = vld [vmem:[#allocation7 + $0x7c] sm:$0xf]
    %v683 = vld [vmem:[#allocation7 + $0x80] sm:$0xf]
    %v684 = vld [vmem:[#allocation7 + $0x84] sm:$0xf]
    %v685 = vld [vmem:[#allocation7 + $0x88] sm:$0xf]
    %v686 = vld [vmem:[#allocation7 + $0x8c] sm:$0xf]
    %v687 = vld [vmem:[#allocation7 + $0x90] sm:$0xf]
    %v688 = vld [vmem:[#allocation7 + $0x94] sm:$0xf]
    %v689 = vld [vmem:[#allocation7 + $0x98] sm:$0xf]
    %v690 = vld [vmem:[#allocation7 + $0x9c] sm:$0xf]
    %v691 = vld [vmem:[#allocation7 + $0xa0] sm:$0xf]
    %v692 = vld [vmem:[#allocation7 + $0xa4] sm:$0xf]
    %v693 = vld [vmem:[#allocation7 + $0xa8] sm:$0xf]
    %v694 = vld [vmem:[#allocation7 + $0xac] sm:$0xf]
    %v695 = vld [vmem:[#allocation7 + $0xb0] sm:$0xf]
    %v696 = vld [vmem:[#allocation7 + $0xb4] sm:$0xf]
    %v697 = vld [vmem:[#allocation7 + $0xb8] sm:$0xf]
    %v698 = vld [vmem:[#allocation7 + $0xbc] sm:$0xf]
    %v699 = vld [vmem:[#allocation7 + $0xc0] sm:$0xf]
    %v700 = vld [vmem:[#allocation7 + $0xc4] sm:$0xf]
    %v701 = vld [vmem:[#allocation7 + $0xc8] sm:$0xf]
    %v702 = vld [vmem:[#allocation7 + $0xcc] sm:$0xf]
    %v703 = vld [vmem:[#allocation7 + $0xd0] sm:$0xf]
    %v704 = vld [vmem:[#allocation7 + $0xd4] sm:$0xf]
    %v705 = vld [vmem:[#allocation7 + $0xd8] sm:$0xf]
    %v706 = vld [vmem:[#allocation7 + $0xdc] sm:$0xf]
    %v707 = vld [vmem:[#allocation7 + $0xe0] sm:$0xf]
    %v708 = vld [vmem:[#allocation7 + $0xe4] sm:$0xf]
    %v709 = vld [vmem:[#allocation7 + $0xe8] sm:$0xf]
    %v710 = vld [vmem:[#allocation7 + $0xec] sm:$0xf]
    %v711 = vld [vmem:[#allocation7 + $0xf0] sm:$0xf]
    %v712 = vld [vmem:[#allocation7 + $0xf4] sm:$0xf]
    %v713 = vld [vmem:[#allocation7 + $0xf8] sm:$0xf]
    %v714 = vld [vmem:[#allocation7 + $0xfc] sm:$0xf]
    %v779 = vunpack.c.l.b16 %v651
    %v780 = vunpack.c.l.b16 %v652
    %v781 = vunpack.c.l.b16 %v653
    %v782 = vunpack.c.l.b16 %v654
    %v783 = vunpack.c.l.b16 %v655
    %v784 = vunpack.c.l.b16 %v656
    %v785 = vunpack.c.l.b16 %v657
    %v786 = vunpack.c.l.b16 %v658
    %v787 = vunpack.c.l.b16 %v659
    %v788 = vunpack.c.l.b16 %v660
    %v789 = vunpack.c.l.b16 %v661
    %v790 = vunpack.c.l.b16 %v662
    %v791 = vunpack.c.l.b16 %v663
    %v792 = vunpack.c.l.b16 %v664
    %v793 = vunpack.c.l.b16 %v665
    %v794 = vunpack.c.l.b16 %v666
    %v795 = vunpack.c.l.b16 %v667
    %v796 = vunpack.c.l.b16 %v668
    %v797 = vunpack.c.l.b16 %v669
    %v798 = vunpack.c.l.b16 %v670
    %v799 = vunpack.c.l.b16 %v671
    %v800 = vunpack.c.l.b16 %v672
    %v801 = vunpack.c.l.b16 %v673
    %v802 = vunpack.c.l.b16 %v674
    %v803 = vunpack.c.l.b16 %v675
    %v804 = vunpack.c.l.b16 %v676
    %v805 = vunpack.c.l.b16 %v677
    %v806 = vunpack.c.l.b16 %v678
    %v807 = vunpack.c.l.b16 %v679
    %v808 = vunpack.c.l.b16 %v680
    %v809 = vunpack.c.l.b16 %v681
    %v810 = vunpack.c.l.b16 %v682
    %v811 = vunpack.c.l.b16 %v683
    %v812 = vunpack.c.l.b16 %v684
    %v813 = vunpack.c.l.b16 %v685
    %v814 = vunpack.c.l.b16 %v686
    %v815 = vunpack.c.l.b16 %v687
    %v816 = vunpack.c.l.b16 %v688
    %v817 = vunpack.c.l.b16 %v689
    %v818 = vunpack.c.l.b16 %v690
    %v819 = vunpack.c.l.b16 %v691
    %v820 = vunpack.c.l.b16 %v692
    %v821 = vunpack.c.l.b16 %v693
    %v822 = vunpack.c.l.b16 %v694
    %v823 = vunpack.c.l.b16 %v695
    %v824 = vunpack.c.l.b16 %v696
    %v825 = vunpack.c.l.b16 %v697
    %v826 = vunpack.c.l.b16 %v698
    %v827 = vunpack.c.l.b16 %v699
    %v828 = vunpack.c.l.b16 %v700
    %v829 = vunpack.c.l.b16 %v701
    %v830 = vunpack.c.l.b16 %v702
    %v831 = vunpack.c.l.b16 %v703
    %v832 = vunpack.c.l.b16 %v704
    %v833 = vunpack.c.l.b16 %v705
    %v834 = vunpack.c.l.b16 %v706
    %v835 = vunpack.c.l.b16 %v707
    %v836 = vunpack.c.l.b16 %v708
    %v837 = vunpack.c.l.b16 %v709
    %v838 = vunpack.c.l.b16 %v710
    %v839 = vunpack.c.l.b16 %v711
    %v840 = vunpack.c.l.b16 %v712
    %v841 = vunpack.c.l.b16 %v713
    %v842 = vunpack.c.l.b16 %v714
    %v843 = vpack.c.b16 %v780, %v779
    %v844 = vpack.c.b16 %v782, %v781
    %v845 = vpack.c.b16 %v784, %v783
    %v846 = vpack.c.b16 %v786, %v785
    %v847 = vpack.c.b16 %v788, %v787
    %v848 = vpack.c.b16 %v790, %v789
    %v849 = vpack.c.b16 %v792, %v791
    %v850 = vpack.c.b16 %v794, %v793
    %v851 = vpack.c.b16 %v796, %v795
    %v852 = vpack.c.b16 %v798, %v797
    %v853 = vpack.c.b16 %v800, %v799
    %v854 = vpack.c.b16 %v802, %v801
    %v855 = vpack.c.b16 %v804, %v803
    %v856 = vpack.c.b16 %v806, %v805
    %v857 = vpack.c.b16 %v808, %v807
    %v858 = vpack.c.b16 %v810, %v809
    %v859 = vpack.c.b16 %v812, %v811
    %v860 = vpack.c.b16 %v814, %v813
    %v861 = vpack.c.b16 %v816, %v815
    %v862 = vpack.c.b16 %v818, %v817
    %v863 = vpack.c.b16 %v820, %v819
    %v864 = vpack.c.b16 %v822, %v821
    %v865 = vpack.c.b16 %v824, %v823
    %v866 = vpack.c.b16 %v826, %v825
    %v867 = vpack.c.b16 %v828, %v827
    %v868 = vpack.c.b16 %v830, %v829
    %v869 = vpack.c.b16 %v832, %v831
    %v870 = vpack.c.b16 %v834, %v833
    %v871 = vpack.c.b16 %v836, %v835
    %v872 = vpack.c.b16 %v838, %v837
    %v873 = vpack.c.b16 %v840, %v839
    %v874 = vpack.c.b16 %v842, %v841
    %907 = vmatprep.subr.bf16.mxu0 0
    %908 = vmatpush1.bf16.msra.mxu0 %v850
    %909 = vmatprep.subr.bf16.mxu0 0
    %910 = vmatpush1.bf16.msra.mxu0 %v849
    %911 = vmatprep.subr.bf16.mxu0 0
    %912 = vmatpush1.bf16.msra.mxu0 %v848
    %913 = vmatprep.subr.bf16.mxu0 0
    %914 = vmatpush1.bf16.msra.mxu0 %v847
    %915 = vmatprep.subr.bf16.mxu0 0
    %916 = vmatpush1.bf16.msra.mxu0 %v846
    %917 = vmatprep.subr.bf16.mxu0 0
    %918 = vmatpush1.bf16.msra.mxu0 %v845
    %919 = vmatprep.subr.bf16.mxu0 0
    %920 = vmatpush1.bf16.msra.mxu0 %v844
    %921 = vmatprep.subr.bf16.mxu0 0
    %922 = vmatpush1.bf16.msra.mxu0 %v843
    %923 = vmatprep.subr.bf16.mxu0 0
    %924 = vmatpush2.bf16.msra.mxu0 %v858
    %925 = vmatprep.subr.bf16.mxu0 0
    %926 = vmatpush2.bf16.msra.mxu0 %v857
    %927 = vmatprep.subr.bf16.mxu0 0
    %928 = vmatpush2.bf16.msra.mxu0 %v856
    %929 = vmatprep.subr.bf16.mxu0 0
    %930 = vmatpush2.bf16.msra.mxu0 %v855
    %931 = vmatprep.subr.bf16.mxu0 0
    %932 = vmatpush2.bf16.msra.mxu0 %v854
    %933 = vmatprep.subr.bf16.mxu0 0
    %934 = vmatpush2.bf16.msra.mxu0 %v853
    %935 = vmatprep.subr.bf16.mxu0 0
    %936 = vmatpush2.bf16.msra.mxu0 %v852
    %937 = vmatprep.subr.bf16.mxu0 0
    %938 = vmatpush2.bf16.msra.mxu0 %v851
    %939 = vmatprep.mubr.bf16.mxu0 %v648
    %940 = vmatmul.mubr.bf16.gmra.mxu0 %v647
    %v941 = vpop.f32.mrf.mxu0
    %v942 = vadd.f32 0.0, %v941
    %v943 = vpop.f32.mrf.mxu0
    %v944 = vpop.f32.mrf.mxu0
    %v945 = vpop.f32.mrf.mxu0
    %946 = vdwg.mxu0
    %947 = vmatprep.subr.bf16.mxu0 0
    %948 = vmatpush1.bf16.msra.mxu0 %v866
    %949 = vmatprep.subr.bf16.mxu0 0
    %950 = vmatpush1.bf16.msra.mxu0 %v865
    %951 = vmatprep.subr.bf16.mxu0 0
    %952 = vmatpush1.bf16.msra.mxu0 %v864
    %953 = vmatprep.subr.bf16.mxu0 0
    %954 = vmatpush1.bf16.msra.mxu0 %v863
    %955 = vmatprep.subr.bf16.mxu0 0
    %956 = vmatpush1.bf16.msra.mxu0 %v862
    %957 = vmatprep.subr.bf16.mxu0 0
    %958 = vmatpush1.bf16.msra.mxu0 %v861
    %959 = vmatprep.subr.bf16.mxu0 0
    %960 = vmatpush1.bf16.msra.mxu0 %v860
    %961 = vmatprep.subr.bf16.mxu0 0
    %962 = vmatpush1.bf16.msra.mxu0 %v859
    %963 = vmatprep.subr.bf16.mxu0 0
    %964 = vmatpush2.bf16.msra.mxu0 %v874
    %965 = vmatprep.subr.bf16.mxu0 0
    %966 = vmatpush2.bf16.msra.mxu0 %v873
    %967 = vmatprep.subr.bf16.mxu0 0
    %968 = vmatpush2.bf16.msra.mxu0 %v872
    %969 = vmatprep.subr.bf16.mxu0 0
    %970 = vmatpush2.bf16.msra.mxu0 %v871
    %971 = vmatprep.subr.bf16.mxu0 0
    %972 = vmatpush2.bf16.msra.mxu0 %v870
    %973 = vmatprep.subr.bf16.mxu0 0
    %974 = vmatpush2.bf16.msra.mxu0 %v869
    %975 = vmatprep.subr.bf16.mxu0 0
    %976 = vmatpush2.bf16.msra.mxu0 %v868
    %977 = vmatprep.subr.bf16.mxu0 0
    %978 = vmatpush2.bf16.msra.mxu0 %v867
    %979 = vmatprep.mubr.bf16.mxu0 %v650
    %980 = vmatmul.mubr.bf16.gmra.mxu0 %v649
    %v981 = vpop.f32.mrf.mxu0
    %v982 = vadd.f32 %v942, %v981
    %v983 = vpop.f32.mrf.mxu0
    %v984 = vpop.f32.mrf.mxu0
    %v985 = vpop.f32.mrf.mxu0
    %986 = vdwg.mxu0
    %987 = vmatprep.subr.bf16.mxu0 0
    %988 = vmatpush1.bf16.msra.mxu0 %v850
    %989 = vmatprep.subr.bf16.mxu0 0
    %990 = vmatpush1.bf16.msra.mxu0 %v849
    %991 = vmatprep.subr.bf16.mxu0 0
    %992 = vmatpush1.bf16.msra.mxu0 %v848
    %993 = vmatprep.subr.bf16.mxu0 0
    %994 = vmatpush1.bf16.msra.mxu0 %v847
    %995 = vmatprep.subr.bf16.mxu0 0
    %996 = vmatpush1.bf16.msra.mxu0 %v846
    %997 = vmatprep.subr.bf16.mxu0 0
    %998 = vmatpush1.bf16.msra.mxu0 %v845
    %999 = vmatprep.subr.bf16.mxu0 0
    %1000 = vmatpush1.bf16.msra.mxu0 %v844
    %1001 = vmatprep.subr.bf16.mxu0 0
    %1002 = vmatpush1.bf16.msra.mxu0 %v843
    %1003 = vmatprep.subr.bf16.mxu0 0
    %1004 = vmatpush2.bf16.msra.mxu0 %v858
    %1005 = vmatprep.subr.bf16.mxu0 0
    %1006 = vmatpush2.bf16.msra.mxu0 %v857
    %1007 = vmatprep.subr.bf16.mxu0 0
    %1008 = vmatpush2.bf16.msra.mxu0 %v856
    %1009 = vmatprep.subr.bf16.mxu0 0
    %1010 = vmatpush2.bf16.msra.mxu0 %v855
    %1011 = vmatprep.subr.bf16.mxu0 0
    %1012 = vmatpush2.bf16.msra.mxu0 %v854
    %1013 = vmatprep.subr.bf16.mxu0 0
    %1014 = vmatpush2.bf16.msra.mxu0 %v853
    %1015 = vmatprep.subr.bf16.mxu0 0
    %1016 = vmatpush2.bf16.msra.mxu0 %v852
    %1017 = vmatprep.subr.bf16.mxu0 0
    %1018 = vmatpush2.bf16.msra.mxu0 %v851
    %1019 = vmatprep.mubr.bf16.mxu0 %v636
    %1020 = vmatmul.mubr.bf16.gmra.mxu0 %v635
    %v1021 = vpop.f32.mrf.mxu0
    %v1022 = vadd.f32 %v982, %v1021
    %v1023 = vpop.f32.mrf.mxu0
    %v1024 = vpop.f32.mrf.mxu0
    %v1025 = vpop.f32.mrf.mxu0
    %1026 = vdwg.mxu0
    %1027 = vmatprep.subr.bf16.mxu0 0
    %1028 = vmatpush1.bf16.msra.mxu0 %v866
    %1029 = vmatprep.subr.bf16.mxu0 0
    %1030 = vmatpush1.bf16.msra.mxu0 %v865
    %1031 = vmatprep.subr.bf16.mxu0 0
    %1032 = vmatpush1.bf16.msra.mxu0 %v864
    %1033 = vmatprep.subr.bf16.mxu0 0
    %1034 = vmatpush1.bf16.msra.mxu0 %v863
    %1035 = vmatprep.subr.bf16.mxu0 0
    %1036 = vmatpush1.bf16.msra.mxu0 %v862
    %1037 = vmatprep.subr.bf16.mxu0 0
    %1038 = vmatpush1.bf16.msra.mxu0 %v861
    %1039 = vmatprep.subr.bf16.mxu0 0
    %1040 = vmatpush1.bf16.msra.mxu0 %v860
    %1041 = vmatprep.subr.bf16.mxu0 0
    %1042 = vmatpush1.bf16.msra.mxu0 %v859
    %1043 = vmatprep.subr.bf16.mxu0 0
    %1044 = vmatpush2.bf16.msra.mxu0 %v874
    %1045 = vmatprep.subr.bf16.mxu0 0
    %1046 = vmatpush2.bf16.msra.mxu0 %v873
    %1047 = vmatprep.subr.bf16.mxu0 0
    %1048 = vmatpush2.bf16.msra.mxu0 %v872
    %1049 = vmatprep.subr.bf16.mxu0 0
    %1050 = vmatpush2.bf16.msra.mxu0 %v871
    %1051 = vmatprep.subr.bf16.mxu0 0
    %1052 = vmatpush2.bf16.msra.mxu0 %v870
    %1053 = vmatprep.subr.bf16.mxu0 0
    %1054 = vmatpush2.bf16.msra.mxu0 %v869
    %1055 = vmatprep.subr.bf16.mxu0 0
    %1056 = vmatpush2.bf16.msra.mxu0 %v868
    %1057 = vmatprep.subr.bf16.mxu0 0
    %1058 = vmatpush2.bf16.msra.mxu0 %v867
    %1059 = vmatprep.mubr.bf16.mxu0 %v638
    %1060 = vmatmul.mubr.bf16.gmra.mxu0 %v637
    %v1061 = vpop.f32.mrf.mxu0
    %v1062 = vadd.f32 %v1022, %v1061
    %v1063 = vpop.f32.mrf.mxu0
    %v1064 = vpop.f32.mrf.mxu0
    %v1065 = vpop.f32.mrf.mxu0
    %1066 = vdwg.mxu0
    %v1067 = vmul.f32 %v1062, 0.020833334
    %1068 = vst [vmem:[#allocation8] sm:$0xff] %v1067
    // Predicated region
    $region26: #{tpu_custom_call.1} parent=1 // pred_check
      _
    $region27: #{tpu_custom_call.1} parent=1 // pred_check_branch
      %1070 = sbr.rel (0) target = $region29
    $region28: #{tpu_custom_call.1} parent=1 // pred_region
      %s1072 = ssub.s32 128, 128
      %1073 = vsyncadd [#allocation4], %s1072
      %s1075 = sshll.u32 [#allocation8], 4
      %s1076 = int_to_ptr.vmem [resolvable:$true] %s1075
      %1078 = dma.vmem_to_hbm [thread:$0]  %s1076, 128, %s3, [#allocation4]
    $region29: #{tpu_custom_call.1} parent=1 // pred_fallthru
      _
    // Predicated region
    $region30: #{tpu_custom_call.1} parent=1 // pred_check
      _
    $region31: #{tpu_custom_call.1} parent=1 // pred_check_branch
      %1080 = sbr.rel (0) target = $region33
    $region32: #{tpu_custom_call.1} parent=1 // pred_region
      %1081 = dma.done [#allocation4], 128
    $region33: #{tpu_custom_call.1} parent=1 // pred_fallthru
      _
    %1082 = vsyncpa [#allocation3], 1
    %1083 = vsyncpa [#allocation6], 1
    %1084 = vsyncpa [#allocation4], 1

</llo_original>
